<compile_context>
chip_gen: v7x
topology: tpu7x:2x2x1
jax: 0.10.0
libtpu: 0.0.40
codegen_flags: <defaults>
</compile_context>

<pallas_src>
import functools

import jax
import jax.numpy as jnp
import numpy as np
from jax.experimental import pallas as pl
from jax.experimental.pallas import tpu as pltpu


def _round_up(x, m):
    return ((x + m - 1) // m) * m


_VMEM_TARGET = 40 << 20      # target working set (fits v7x's 64 MiB with margin)
_VMEM_LIMIT_CAP = 48 << 20   # never ask Mosaic for more than this


def _tensorcores_per_device():
    """Best-effort TensorCores-per-chip (v5e/v6e: 1, v7x/megacore: 2)."""
    try:
        info = pltpu.get_tpu_info()
        for name in ("num_cores", "core_count", "num_tensorcores",
                     "tensor_cores", "cores_per_chip"):
            val = getattr(info, name, None)
            if val:
                return int(val)
    except Exception:
        pass
    try:
        return int(getattr(jax.devices()[0], "num_cores", 1) or 1)
    except Exception:
        return 1


def _pick_tile_k(p, rows, dim, nc_pad, bt, max_tile_k=None):
    """Largest multiple-of-128 tile that divides P exactly and fits VMEM."""
    static = (4 * rows * dim                      # f32 accumulator
              + 2 * 4 * dim * nc_pad              # fc weight (double-buffered)
              + 2 * 4 * (dim + nc_pad)            # folded const + fc bias
              + 2 * 4 * bt * nc_pad)              # output block
    budget = _VMEM_TARGET - static
    if p % 128 != 0:
        return p                                  # non-128 trailing dims must be full
    cap = p if max_tile_k is None else min(p, max_tile_k)
    best = 128
    for t in range(128, cap + 1, 128):
        if p % t:
            continue
        stream = 2 * 4 * (rows * t + t * dim)     # f32 token + weight blocks, 2-deep
        if stream <= budget:
            best = t
    return best


# ----------------------------------------------------------------------------
# Kernels
# ----------------------------------------------------------------------------
def _epilogue(emb, const_ref, wfc_ref, bfc_ref, out_ref, *, bt, n_tok):
    """mean over tokens -> +(b_embed + cls) -> fc head (f32)."""
    dim = emb.shape[-1]
    pooled = jnp.sum(emb.reshape(bt, n_tok, dim), axis=1) * (1.0 / float(n_tok))
    cls_feat = pooled + const_ref[...]                       # (bt, dim)
    logits = jnp.dot(cls_feat, wfc_ref[...],
                     preferred_element_type=jnp.float32) + bfc_ref[...]
    out_ref[...] = logits.astype(out_ref.dtype)


def _eva_single_kernel(tok_ref, we_ref, const_ref, wfc_ref, bfc_ref, out_ref,
                       *, bt, n_tok):
    # Whole K reduction fits one grid step: no accumulator / pl.when machinery.
    emb = jnp.dot(tok_ref[...].astype(jnp.bfloat16),
                  we_ref[...].astype(jnp.bfloat16),
                  preferred_element_type=jnp.float32)        # (bt*n_tok, dim)
    _epilogue(emb, const_ref, wfc_ref, bfc_ref, out_ref, bt=bt, n_tok=n_tok)


def _eva_multi_kernel(tok_ref, we_ref, const_ref, wfc_ref, bfc_ref, out_ref,
                      acc_ref, *, bt, n_tok):
    # tok_ref: (bt*n_tok, tile_k) f32  -> cast to bf16 in VMEM (no HBM cast pass)
    # we_ref:  (tile_k, dim)      f32  -> cast to bf16 in VMEM
    # acc_ref: (bt*n_tok, dim)    f32  K-reduction accumulator (VMEM scratch)
    k = pl.program_id(1)

    @pl.when(k == 0)
    def _init():
        acc_ref[...] = jnp.zeros_like(acc_ref)

    acc_ref[...] += jnp.dot(tok_ref[...].astype(jnp.bfloat16),
                            we_ref[...].astype(jnp.bfloat16),
                            preferred_element_type=jnp.float32)

    @pl.when(k == pl.num_programs(1) - 1)
    def _finalize():
        _epilogue(acc_ref[...], const_ref, wfc_ref, bfc_ref, out_ref,
                  bt=bt, n_tok=n_tok)


# ----------------------------------------------------------------------------
# Fused call
# ----------------------------------------------------------------------------
def _eva_fused(tokens, n_tok, params, *, max_tile_k=None):
    """tokens: (B*n_tok, P) f32 depth-slice tokens  ->  logits (B, n_classes)."""
    rows_total, P = tokens.shape
    B = rows_total // n_tok
    w_embed = params["w_embed"]                    # (P, dim) f32, stays in HBM
    dim = w_embed.shape[1]
    n_classes = params["w_fc"].shape[1]
    nc_pad = _round_up(n_classes, 128)             # lane-dense logits slab

    # Batch split across the "parallel" axis only on multi-TC chips (v7x).
    # On single-TC v5e/v6e the grid is sequential and a split would re-stream
    # the full (P, dim) patch-embed weight from HBM for the second group.
    # TODO(synk): on v7x, splitting `dim` (w_embed columns) across the
    # parallel axis instead of the batch would keep weight HBM traffic at 1x.
    if _tensorcores_per_device() >= 2 and B % 16 == 0:
        n_groups, bt = 2, B // 2
    else:
        n_groups, bt = 1, B
    rows_g = bt * n_tok

    tile_k = _pick_tile_k(P, rows_g, dim, nc_pad, bt, max_tile_k)
    k_tiles = P // tile_k

    # Tiny operand prep only (no token / w_embed materialization in the wrapper).
    const = (params["b_embed"] + params["cls"]).astype(jnp.float32)        # (1, dim)
    wfc = jnp.pad(params["w_fc"].astype(jnp.float32),
                  ((0, 0), (0, nc_pad - n_classes)))                        # (dim, nc_pad)
    bfc = jnp.pad(params["b_fc"].astype(jnp.float32),
                  ((0, 0), (0, nc_pad - n_classes)))                        # (1, nc_pad)

    # Scheduling hints (weight is streamed once per batch group).
    flops = 2.0 * rows_total * P * dim + 2.0 * B * dim * nc_pad
    bytes_accessed = (rows_total * P * 4
                      + n_groups * P * dim * 4
                      + (dim + dim * nc_pad + nc_pad) * 4
                      + B * nc_pad * 4)
    cost = pl.CostEstimate(flops=int(flops), transcendentals=0,
                           bytes_accessed=int(bytes_accessed))

    stream = 2 * 4 * (rows_g * tile_k + tile_k * dim)
    static = (4 * rows_g * dim
              + 2 * 4 * (dim * nc_pad + dim + nc_pad + bt * nc_pad))
    vmem_limit = int(min(max(stream + static + (8 << 20), 32 << 20),
                         _VMEM_LIMIT_CAP))

    if k_tiles > 1:
        kernel = functools.partial(_eva_multi_kernel, bt=bt, n_tok=n_tok)
        scratch = [pltpu.VMEM((rows_g, dim), jnp.float32)]
    else:
        kernel = functools.partial(_eva_single_kernel, bt=bt, n_tok=n_tok)
        scratch = []

    logits_pad = pl.pallas_call(
        kernel,
        out_shape=jax.ShapeDtypeStruct((B, nc_pad), jnp.float32),
        grid_spec=pltpu.PrefetchScalarGridSpec(
            num_scalar_prefetch=0,
            grid=(n_groups, k_tiles),
            in_specs=[
                pl.BlockSpec((rows_g, tile_k), lambda g, k: (g, k)),   # tokens (f32)
                pl.BlockSpec((tile_k, dim), lambda g, k: (k, 0)),      # w_embed (f32)
                pl.BlockSpec((1, dim), lambda g, k: (0, 0)),           # b_embed + cls
                pl.BlockSpec((dim, nc_pad), lambda g, k: (0, 0)),      # fc weight
                pl.BlockSpec((1, nc_pad), lambda g, k: (0, 0)),        # fc bias
            ],
            out_specs=pl.BlockSpec((bt, nc_pad), lambda g, k: (g, 0)),
            scratch_shapes=scratch,
        ),
        compiler_params=pltpu.CompilerParams(
            dimension_semantics=("parallel", "arbitrary"),
            vmem_limit_bytes=vmem_limit,
        ),
        cost_estimate=cost,
    )(tokens.astype(jnp.float32), w_embed.astype(jnp.float32), const, wfc, bfc)

    return logits_pad[:, :n_classes]


# ----------------------------------------------------------------------------
# Module wrapper
# ----------------------------------------------------------------------------
def init_params(key, patch_dim, dim, n_classes):
    k1, k2, k3, k4, k5 = jax.random.split(key, 5)
    return {
        # stand-in encoder params (the real EVA encoder is injected externally)
        "w_embed": jax.random.normal(k1, (patch_dim, dim), jnp.float32) * 0.02,
        "b_embed": jax.random.normal(k2, (1, dim), jnp.float32) * 0.02,
        "cls": jax.random.normal(k3, (1, dim), jnp.float32) * 0.02,
        # fc = nn.Linear(dim, n_classes)
        "w_fc": jax.random.normal(k4, (dim, n_classes), jnp.float32) * 0.02,
        "b_fc": jax.random.normal(k5, (1, n_classes), jnp.float32) * 0.02,
    }


def eva_classifier_forward(params, x, interpolate=False, *, max_tile_k=None):
    if interpolate:
        # nnf.interpolate(x, size=(28, 224, 224), mode='trilinear') — glue op,
        # done by XLA outside the kernel.
        B, C = x.shape[0], x.shape[1]
        x = jax.image.resize(x, (B, C, 28, 224, 224), method="trilinear")
    # SpatialTensor(x, 0) is a metadata-only tensor wrapper; identity here.
    B, C, D, H, W = x.shape
    if C == 1:
        tokens = x.reshape(B * D, H * W)            # contiguous view, no HBM copy
    else:
        # TODO(synk): fold this C>1 depth-slice tokenization into the kernel
        # via a channel grid axis to avoid one extra HBM pass (kept as a single
        # fused XLA transpose so token rows stay contiguous for full-M MXU dots).
        tokens = jnp.transpose(x, (0, 2, 1, 3, 4)).reshape(B * D, C * H * W)
    return _eva_fused(tokens, D, params, max_tile_k=max_tile_k)


def _reference_forward(params, x):
    """Pure-JAX reference matching the kernel's mixed-precision math."""
    B, C, D, H, W = x.shape
    if C == 1:
        tokens = x.reshape(B, D, H * W)
    else:
        tokens = jnp.transpose(x, (0, 2, 1, 3, 4)).reshape(B, D, C * H * W)
    emb = jnp.dot(tokens.astype(jnp.bfloat16),
                  params["w_embed"].astype(jnp.bfloat16),
                  preferred_element_type=jnp.float32)                 # (B, N, dim)
    cls = jnp.mean(emb, axis=1) + params["b_embed"] + params["cls"]   # (B, dim)
    return jnp.dot(cls, params["w_fc"],
                   preferred_element_type=jnp.float32) + params["b_fc"]


if __name__ == "__main__":
    key = jax.random.PRNGKey(0)
    kx1, kx2, kp1, kp2 = jax.random.split(key, 4)
    dim, n_classes = 128, 8

    # Case 1: multi-channel volume (C > 1 tokenization path, single K tile).
    B, C, D, H, W = 2, 4, 8, 8, 8                 # P = C*H*W = 256
    x1 = jax.random.normal(kx1, (B, C, D, H, W), jnp.float32)
    p1 = init_params(kp1, C * H * W, dim, n_classes)
    logits1 = jax.block_until_ready(eva_classifier_forward(p1, x1))
    assert logits1.shape == (B, n_classes)
    ref1 = _reference_forward(p1, x1)
    assert np.allclose(np.asarray(logits1), np.asarray(ref1),
                       atol=1e-3, rtol=1e-3), "case 1 mismatch vs reference"

    # Case 2: single-channel volume (zero-copy token path) with a forced small
    # tile_k so the multi-step K accumulator path is exercised.
    B2, C2, D2, H2, W2 = 2, 1, 8, 16, 16          # P = 256 -> 2 K tiles of 128
    x2 = jax.random.normal(kx2, (B2, C2, D2, H2, W2), jnp.float32)
    p2 = init_params(kp2, C2 * H2 * W2, dim, n_classes)
    logits2 = jax.block_until_ready(
        eva_classifier_forward(p2, x2, max_tile_k=128))
    assert logits2.shape == (B2, n_classes)
    ref2 = _reference_forward(p2, x2)
    assert np.allclose(np.asarray(logits2), np.asarray(ref2),
                       atol=1e-3, rtol=1e-3), "case 2 mismatch vs reference"

    print("KERNEL_OK")
</pallas_src>

<mosaic_0001>
module attributes {stable_mosaic.version = 11 : i64} {
  func.func @_eva_single_kernel(%arg0: i32, %arg1: i32, %arg2: memref<16x256xf32, #tpu.memory_space<vmem>>, %arg3: memref<256x128xf32, #tpu.memory_space<vmem>>, %arg4: memref<1x128xf32, #tpu.memory_space<vmem>>, %arg5: memref<128x128xf32, #tpu.memory_space<vmem>>, %arg6: memref<1x128xf32, #tpu.memory_space<vmem>>, %arg7: memref<2x128xf32, #tpu.memory_space<vmem>>) attributes {dimension_semantics = [#tpu.dimension_semantics<parallel>, #tpu.dimension_semantics<arbitrary>], iteration_bounds = array<i64: 1, 1>, scalar_prefetch = 0 : i64, scratch_operands = 0 : i64, tpu.core_type = #tpu.core_type<tc>, window_params = [{transform_indices = @transform_0, window_bounds = array<i64: 16, 256>}, {transform_indices = @transform_1, window_bounds = array<i64: 256, 128>}, {pipeline_mode = #tpu.pipeline_mode<synchronous>, transform_indices = @transform_2, window_bounds = array<i64: 1, 128>}, {pipeline_mode = #tpu.pipeline_mode<synchronous>, transform_indices = @transform_3, window_bounds = array<i64: 128, 128>}, {pipeline_mode = #tpu.pipeline_mode<synchronous>, transform_indices = @transform_4, window_bounds = array<i64: 1, 128>}, {transform_indices = @transform_5, window_bounds = array<i64: 2, 128>}]} {
    %c0 = arith.constant 0 : index
    %c0_0 = arith.constant 0 : index
    %0 = vector.load %arg2[%c0, %c0_0] : memref<16x256xf32, #tpu.memory_space<vmem>>, vector<16x256xf32>
    %1 = arith.truncf %0 : vector<16x256xf32> to vector<16x256xbf16>
    %c0_1 = arith.constant 0 : index
    %c0_2 = arith.constant 0 : index
    %2 = vector.load %arg3[%c0_1, %c0_2] : memref<256x128xf32, #tpu.memory_space<vmem>>, vector<256x128xf32>
    %3 = arith.truncf %2 : vector<256x128xf32> to vector<256x128xbf16>
    %cst = arith.constant dense<0.000000e+00> : vector<16x128xf32>
    %4 = tpu.matmul %1, %3, %cst {dimension_numbers = #tpu.dot_dimension_numbers<[1], [0], [0], [1], [0, 0, 1, 1], [], []>} : vector<16x256xbf16>, vector<256x128xbf16>, vector<16x128xf32> -> vector<16x128xf32>
    %5 = vector.shape_cast %4 : vector<16x128xf32> to vector<2x8x128xf32>
    %cst_3 = arith.constant dense<0.000000e+00> : vector<2x128xf32>
    %6 = vector.multi_reduction <add>, %5, %cst_3 [1] : vector<2x8x128xf32> to vector<2x128xf32>
    %cst_4 = arith.constant 1.250000e-01 : f32
    %7 = vector.broadcast %cst_4 : f32 to vector<2x128xf32>
    %8 = arith.mulf %6, %7 : vector<2x128xf32>
    %c0_5 = arith.constant 0 : index
    %c0_6 = arith.constant 0 : index
    %9 = vector.load %arg4[%c0_5, %c0_6] : memref<1x128xf32, #tpu.memory_space<vmem>>, vector<1x128xf32>
    %10 = vector.broadcast %9 : vector<1x128xf32> to vector<2x128xf32>
    %11 = arith.addf %8, %10 : vector<2x128xf32>
    %c0_7 = arith.constant 0 : index
    %c0_8 = arith.constant 0 : index
    %12 = vector.load %arg5[%c0_7, %c0_8] : memref<128x128xf32, #tpu.memory_space<vmem>>, vector<128x128xf32>
    %cst_9 = arith.constant dense<0.000000e+00> : vector<2x128xf32>
    %13 = tpu.matmul %11, %12, %cst_9 {dimension_numbers = #tpu.dot_dimension_numbers<[1], [0], [0], [1], [0, 0, 1, 1], [], []>} : vector<2x128xf32>, vector<128x128xf32>, vector<2x128xf32> -> vector<2x128xf32>
    %c0_10 = arith.constant 0 : index
    %c0_11 = arith.constant 0 : index
    %14 = vector.load %arg6[%c0_10, %c0_11] : memref<1x128xf32, #tpu.memory_space<vmem>>, vector<1x128xf32>
    %15 = vector.broadcast %14 : vector<1x128xf32> to vector<2x128xf32>
    %16 = arith.addf %13, %15 : vector<2x128xf32>
    %c0_12 = arith.constant 0 : index
    %c0_13 = arith.constant 0 : index
    %17 = vector.load %arg7[%c0_12, %c0_13] : memref<2x128xf32, #tpu.memory_space<vmem>>, vector<2x128xf32>
    tpu.vector_store %arg7[%c0_12, %c0_13], %16 {strides = array<i32>} : memref<2x128xf32, #tpu.memory_space<vmem>>, vector<2x128xf32>,
    return
  }
  func.func @transform_0(%arg0: i32, %arg1: i32) -> (i32, i32) {
    %c0_i32 = arith.constant 0 : i32
    return %arg0, %arg1 : i32, i32
  }
  func.func @transform_1(%arg0: i32, %arg1: i32) -> (i32, i32) {
    %c0_i32 = arith.constant 0 : i32
    %c0_i32_0 = arith.constant 0 : i32
    return %arg1, %c0_i32 : i32, i32
  }
  func.func @transform_2(%arg0: i32, %arg1: i32) -> (i32, i32) {
    %c0_i32 = arith.constant 0 : i32
    %c0_i32_0 = arith.constant 0 : i32
    %c0_i32_1 = arith.constant 0 : i32
    return %c0_i32, %c0_i32_0 : i32, i32
  }
  func.func @transform_3(%arg0: i32, %arg1: i32) -> (i32, i32) {
    %c0_i32 = arith.constant 0 : i32
    %c0_i32_0 = arith.constant 0 : i32
    %c0_i32_1 = arith.constant 0 : i32
    return %c0_i32, %c0_i32_0 : i32, i32
  }
  func.func @transform_4(%arg0: i32, %arg1: i32) -> (i32, i32) {
    %c0_i32 = arith.constant 0 : i32
    %c0_i32_0 = arith.constant 0 : i32
    %c0_i32_1 = arith.constant 0 : i32
    return %c0_i32, %c0_i32_0 : i32, i32
  }
  func.func @transform_5(%arg0: i32, %arg1: i32) -> (i32, i32) {
    %c0_i32 = arith.constant 0 : i32
    %c0_i32_0 = arith.constant 0 : i32
    return %arg0, %c0_i32 : i32, i32
  }
}

</mosaic_0001>

<llo_original>
// kernel: tpu_custom_call.1
$region0: #{tpu_custom_call.1}
  #allocation0 [shape = 'u32[]', space=smem, size = 0x4, offset = 0x4, fixed_abs, tag = 'smem constant byte address 0x4 - core index']
  #allocation1 [shape = 'u32[144,128]{1,0:T(1,128)}', space=vmem, size = 0x12000, scoped, tag = 'internal scratch']
  %s0 = inlined_call_operand.hbm [shape: f32[16,256], index: 0, kind: input, shape index: {}]
  %s1 = inlined_call_operand.hbm [shape: f32[256,128], index: 1, kind: input, shape index: {}]
  %s2 = inlined_call_operand.vmem [shape: f32[1,128], index: 2, kind: input, shape index: {}]
  %s3 = inlined_call_operand.hbm [shape: f32[128,128], index: 3, kind: input, shape index: {}]
  %s4 = inlined_call_operand.vmem [shape: f32[1,128], index: 4, kind: input, shape index: {}]
  %s5 = inlined_call_operand.hbm [shape: f32[2,128], index: 5, kind: output, shape index: {}]
  %s6 = sld [smem:[#allocation0]]
  $region42: #{tpu_custom_call.1} parent=0
    _
  %s8 = ssub.s32 1, %s6
  %s9 = scalar_select 0, %s8, %s6
  $region1: #{tpu_custom_call.1} parent=0
    #allocation2 [shape = 'u8[16384]{0}', space=vmem, size = 0x4000, scoped, tag = 'input window, operand 0, single buffered']
    #allocation3 [shape = 's32[1]{0}', space=sflag, size = 0x4, scoped, tag = 'scoped memory for tpu_custom_call.1']
    #allocation4 [shape = 's32[1]{0}', space=sflag, size = 0x4, scoped, tag = 'scoped memory for tpu_custom_call.1']
    #allocation5 [shape = 'u8[131072]{0}', space=vmem, size = 0x20000, scoped, tag = 'input window, operand 1, single buffered']
    #allocation6 [shape = 's32[1]{0}', space=sflag, size = 0x4, scoped, tag = 'scoped memory for tpu_custom_call.1']
    #allocation7 [shape = 'u8[65536]{0}', space=vmem, size = 0x10000, scoped, tag = 'input window, operand 3, single buffered']
    #allocation8 [shape = 'u8[1024]{0}', space=vmem, size = 0x400, scoped, tag = 'output window, operand 0, single buffered']
    %10 = vsyncpa [#allocation3], 0
    %11 = vsyncpa [#allocation6], 0
    %12 = vsyncpa [#allocation4], 0
    // Predicated region
    $region2: #{tpu_custom_call.1} parent=1 // pred_check
      _
    $region3: #{tpu_custom_call.1} parent=1 // pred_check_branch
      %14 = sbr.rel (0) target = $region5
    $region4: #{tpu_custom_call.1} parent=1 // pred_region
      %s16 = ssub.s32 512, 512
      %17 = vsyncadd [#allocation3], %s16
      %s18 = sshll.u32 [#allocation2], 4
      %s19 = int_to_ptr.vmem [resolvable:$true] %s18
      %24 = dma.hbm_to_vmem [thread:$0]  %s0, 512, %s19, [#allocation3], 256, 256, 16
    $region5: #{tpu_custom_call.1} parent=1 // pred_fallthru
      _
    // Predicated region
    $region6: #{tpu_custom_call.1} parent=1 // pred_check
      _
    $region7: #{tpu_custom_call.1} parent=1 // pred_check_branch
      %26 = sbr.rel (0) target = $region9
    $region8: #{tpu_custom_call.1} parent=1 // pred_region
      %s28 = ssub.s32 4096, 4096
      %29 = vsyncadd [#allocation6], %s28
      %s30 = sshll.u32 [#allocation5], 4
      %s31 = int_to_ptr.vmem [resolvable:$true] %s30
      %36 = dma.hbm_to_vmem [thread:$0]  %s1, 4096, %s31, [#allocation6], 128, 128, 8
    $region9: #{tpu_custom_call.1} parent=1 // pred_fallthru
      _
    // Predicated region
    $region10: #{tpu_custom_call.1} parent=1 // pred_check
      _
    $region11: #{tpu_custom_call.1} parent=1 // pred_check_branch
      %38 = sbr.rel (0) target = $region13
    $region12: #{tpu_custom_call.1} parent=1 // pred_region
      _
    $region13: #{tpu_custom_call.1} parent=1 // pred_fallthru
      _
    // Predicated region
    $region14: #{tpu_custom_call.1} parent=1 // pred_check
      _
    $region15: #{tpu_custom_call.1} parent=1 // pred_check_branch
      %40 = sbr.rel (0) target = $region17
    $region16: #{tpu_custom_call.1} parent=1 // pred_region
      %s42 = ssub.s32 2048, 2048
      %43 = vsyncadd [#allocation6], %s42
      %s44 = sshll.u32 [#allocation7], 4
      %s45 = int_to_ptr.vmem [resolvable:$true] %s44
      %50 = dma.hbm_to_vmem [thread:$0]  %s3, 2048, %s45, [#allocation6], 128, 128, 8
    $region17: #{tpu_custom_call.1} parent=1 // pred_fallthru
      _
    // Predicated region
    $region18: #{tpu_custom_call.1} parent=1 // pred_check
      _
    $region19: #{tpu_custom_call.1} parent=1 // pred_check_branch
      %52 = sbr.rel (0) target = $region21
    $region20: #{tpu_custom_call.1} parent=1 // pred_region
      _
    $region21: #{tpu_custom_call.1} parent=1 // pred_fallthru
      _
    // Predicated region
    $region22: #{tpu_custom_call.1} parent=1 // pred_check
      _
    $region23: #{tpu_custom_call.1} parent=1 // pred_check_branch
      %54 = sbr.rel (0) target = $region25
    $region24: #{tpu_custom_call.1} parent=1 // pred_region
      %55 = dma.done [#allocation3], 512
    $region25: #{tpu_custom_call.1} parent=1 // pred_fallthru
      _
    // Predicated region
    $region26: #{tpu_custom_call.1} parent=1 // pred_check
      _
    $region27: #{tpu_custom_call.1} parent=1 // pred_check_branch
      %57 = sbr.rel (0) target = $region29
    $region28: #{tpu_custom_call.1} parent=1 // pred_region
      %58 = dma.done [#allocation6], 4096
    $region29: #{tpu_custom_call.1} parent=1 // pred_fallthru
      _
    // Predicated region
    $region30: #{tpu_custom_call.1} parent=1 // pred_check
      _
    $region31: #{tpu_custom_call.1} parent=1 // pred_check_branch
      %60 = sbr.rel (0) target = $region33
    $region32: #{tpu_custom_call.1} parent=1 // pred_region
      %61 = dma.done [#allocation6], 2048
    $region33: #{tpu_custom_call.1} parent=1 // pred_fallthru
      _
    %v63 = vld [vmem:[#allocation2] sm:$0xff]
    %v64 = vld [vmem:[#allocation2 + $0x8] sm:$0xff]
    %v65 = vld [vmem:[#allocation2 + $0x10] sm:$0xff]
    %v66 = vld [vmem:[#allocation2 + $0x18] sm:$0xff]
    %v67 = vpack.c.bf16 %v65, %v63
    %v68 = vpack.c.bf16 %v66, %v64
    %v69 = vld [vmem:[#allocation5] sm:$0xff]
    %v70 = vld [vmem:[#allocation5 + $0x8] sm:$0xff]
    %v71 = vld [vmem:[#allocation5 + $0x10] sm:$0xff]
    %v72 = vld [vmem:[#allocation5 + $0x18] sm:$0xff]
    %v73 = vld [vmem:[#allocation5 + $0x20] sm:$0xff]
    %v74 = vld [vmem:[#allocation5 + $0x28] sm:$0xff]
    %v75 = vld [vmem:[#allocation5 + $0x30] sm:$0xff]
    %v76 = vld [vmem:[#allocation5 + $0x38] sm:$0xff]
    %v77 = vld [vmem:[#allocation5 + $0x40] sm:$0xff]
    %v78 = vld [vmem:[#allocation5 + $0x48] sm:$0xff]
    %v79 = vld [vmem:[#allocation5 + $0x50] sm:$0xff]
    %v80 = vld [vmem:[#allocation5 + $0x58] sm:$0xff]
    %v81 = vld [vmem:[#allocation5 + $0x60] sm:$0xff]
    %v82 = vld [vmem:[#allocation5 + $0x68] sm:$0xff]
    %v83 = vld [vmem:[#allocation5 + $0x70] sm:$0xff]
    %v84 = vld [vmem:[#allocation5 + $0x78] sm:$0xff]
    %v85 = vld [vmem:[#allocation5 + $0x80] sm:$0xff]
    %v86 = vld [vmem:[#allocation5 + $0x88] sm:$0xff]
    %v87 = vld [vmem:[#allocation5 + $0x90] sm:$0xff]
    %v88 = vld [vmem:[#allocation5 + $0x98] sm:$0xff]
    %v89 = vld [vmem:[#allocation5 + $0xa0] sm:$0xff]
    %v90 = vld [vmem:[#allocation5 + $0xa8] sm:$0xff]
    %v91 = vld [vmem:[#allocation5 + $0xb0] sm:$0xff]
    %v92 = vld [vmem:[#allocation5 + $0xb8] sm:$0xff]
    %v93 = vld [vmem:[#allocation5 + $0xc0] sm:$0xff]
    %v94 = vld [vmem:[#allocation5 + $0xc8] sm:$0xff]
    %v95 = vld [vmem:[#allocation5 + $0xd0] sm:$0xff]
    %v96 = vld [vmem:[#allocation5 + $0xd8] sm:$0xff]
    %v97 = vld [vmem:[#allocation5 + $0xe0] sm:$0xff]
    %v98 = vld [vmem:[#allocation5 + $0xe8] sm:$0xff]
    %v99 = vld [vmem:[#allocation5 + $0xf0] sm:$0xff]
    %v100 = vld [vmem:[#allocation5 + $0xf8] sm:$0xff]
    %v101 = vpack.c.bf16 %v70, %v69
    %v102 = vpack.c.bf16 %v72, %v71
    %v103 = vpack.c.bf16 %v74, %v73
    %v104 = vpack.c.bf16 %v76, %v75
    %v105 = vpack.c.bf16 %v78, %v77
    %v106 = vpack.c.bf16 %v80, %v79
    %v107 = vpack.c.bf16 %v82, %v81
    %v108 = vpack.c.bf16 %v84, %v83
    %v109 = vpack.c.bf16 %v86, %v85
    %v110 = vpack.c.bf16 %v88, %v87
    %v111 = vpack.c.bf16 %v90, %v89
    %v112 = vpack.c.bf16 %v92, %v91
    %v113 = vpack.c.bf16 %v94, %v93
    %v114 = vpack.c.bf16 %v96, %v95
    %v115 = vpack.c.bf16 %v98, %v97
    %v116 = vpack.c.bf16 %v100, %v99
    %117 = vmatprep.subr.bf16.mxu0 0
    %118 = vmatpush1.bf16.msra.mxu0 %v101
    %119 = vmatprep.subr.bf16.mxu0 0
    %120 = vmatpush1.bf16.msra.mxu0 %v102
    %121 = vmatprep.subr.bf16.mxu0 0
    %122 = vmatpush1.bf16.msra.mxu0 %v103
    %123 = vmatprep.subr.bf16.mxu0 0
    %124 = vmatpush1.bf16.msra.mxu0 %v104
    %125 = vmatprep.subr.bf16.mxu0 0
    %126 = vmatpush1.bf16.msra.mxu0 %v105
    %127 = vmatprep.subr.bf16.mxu0 0
    %128 = vmatpush1.bf16.msra.mxu0 %v106
    %129 = vmatprep.subr.bf16.mxu0 0
    %130 = vmatpush1.bf16.msra.mxu0 %v107
    %131 = vmatprep.subr.bf16.mxu0 0
    %132 = vmatpush1.bf16.msra.mxu0 %v108
    %133 = vmatprep.subr.bf16.mxu0 0
    %134 = vmatpush1.bf16.msra.mxu0 %v109
    %135 = vmatprep.subr.bf16.mxu0 0
    %136 = vmatpush1.bf16.msra.mxu0 %v110
    %137 = vmatprep.subr.bf16.mxu0 0
    %138 = vmatpush1.bf16.msra.mxu0 %v111
    %139 = vmatprep.subr.bf16.mxu0 0
    %140 = vmatpush1.bf16.msra.mxu0 %v112
    %141 = vmatprep.subr.bf16.mxu0 0
    %142 = vmatpush1.bf16.msra.mxu0 %v113
    %143 = vmatprep.subr.bf16.mxu0 0
    %144 = vmatpush1.bf16.msra.mxu0 %v114
    %145 = vmatprep.subr.bf16.mxu0 0
    %146 = vmatpush1.bf16.msra.mxu0 %v115
    %147 = vmatprep.subr.bf16.mxu0 0
    %148 = vmatpush1.bf16.msra.mxu0 %v116
    %149 = vmatprep.mubr.bf16.mxu0 %v68
    %150 = vmatmul.mubr.bf16.gmra.mrb[0].mxu0 %v67
    %v151 = vpop.f32.mrb[0].mxu0
    %v152 = vadd.f32 0.0, %v151
    %v153 = vpop.f32.mrb[0].mxu0
    %v154 = vpop.f32.mrb[0].mxu0
    %v155 = vadd.f32 0.0, %v154
    %v156 = vpop.f32.mrb[0].mxu0
    %157 = vdwg.mxu0
    %v158 = vrot.slane %v152, 4
    %v159 = vadd.f32 %v152, %v158
    %v160 = vrot.slane %v159, 2
    %v161 = vadd.f32 %v159, %v160
    %v162 = vrot.slane %v161, 1
    %v163 = vadd.f32 %v161, %v162
    %v164 = vrot.slane %v155, 4
    %v165 = vadd.f32 %v155, %v164
    %v166 = vrot.slane %v165, 2
    %v167 = vadd.f32 %v165, %v166
    %v168 = vrot.slane %v167, 1
    %v169 = vadd.f32 %v167, %v168
    %v170 = vmul.f32 %v163, 0.125
    %v171 = vmul.f32 %v169, 0.125
    %v172 = vld [vmem:[%s2] sm:$0x1]
    %v174 = vlaneseq
    %v175 = vshrl.u32 %v174, 7
    %v176 = vsub.s32 0, %v175
    %v177 = vrot.slane %v172, %v176
    %v179 = vadd.f32 %v170, %v177
    %v180 = vadd.f32 %v171, %v177
    %v181 = vld [vmem:[#allocation7] sm:$0xff]
    %v182 = vld [vmem:[#allocation7 + $0x8] sm:$0xff]
    %v183 = vld [vmem:[#allocation7 + $0x10] sm:$0xff]
    %v184 = vld [vmem:[#allocation7 + $0x18] sm:$0xff]
    %v185 = vld [vmem:[#allocation7 + $0x20] sm:$0xff]
    %v186 = vld [vmem:[#allocation7 + $0x28] sm:$0xff]
    %v187 = vld [vmem:[#allocation7 + $0x30] sm:$0xff]
    %v188 = vld [vmem:[#allocation7 + $0x38] sm:$0xff]
    %v189 = vld [vmem:[#allocation7 + $0x40] sm:$0xff]
    %v190 = vld [vmem:[#allocation7 + $0x48] sm:$0xff]
    %v191 = vld [vmem:[#allocation7 + $0x50] sm:$0xff]
    %v192 = vld [vmem:[#allocation7 + $0x58] sm:$0xff]
    %v193 = vld [vmem:[#allocation7 + $0x60] sm:$0xff]
    %v194 = vld [vmem:[#allocation7 + $0x68] sm:$0xff]
    %v195 = vld [vmem:[#allocation7 + $0x70] sm:$0xff]
    %v196 = vld [vmem:[#allocation7 + $0x78] sm:$0xff]
    %v197 = vld [vmem:[%s4] sm:$0x1]
    %v199 = vlaneseq
    %v200 = vshrl.u32 %v199, 7
    %v201 = vsub.s32 0, %v200
    %v202 = vrot.slane %v197, %v201
    %v206 = vrot.slane %v180, 7
    %vm207 = vcmask 1041409
    %v208 = vsel %vm207, %v206, %v179
    %210 = vmatprep.subr.mxu0 0.0
    %211 = vmatpush1.msra.mxu0 %v181
    %212 = vmatprep.subr.mxu0 0.0
    %213 = vmatpush1.msra.mxu0 %v182
    %214 = vmatprep.subr.mxu0 0.0
    %215 = vmatpush1.msra.mxu0 %v183
    %216 = vmatprep.subr.mxu0 0.0
    %217 = vmatpush1.msra.mxu0 %v184
    %218 = vmatprep.subr.mxu0 0.0
    %219 = vmatpush1.msra.mxu0 %v185
    %220 = vmatprep.subr.mxu0 0.0
    %221 = vmatpush1.msra.mxu0 %v186
    %222 = vmatprep.subr.mxu0 0.0
    %223 = vmatpush1.msra.mxu0 %v187
    %224 = vmatprep.subr.mxu0 0.0
    %225 = vmatpush1.msra.mxu0 %v188
    %226 = vmatprep.subr.mxu0 0.0
    %227 = vmatpush1.msra.mxu0 %v189
    %228 = vmatprep.subr.mxu0 0.0
    %229 = vmatpush1.msra.mxu0 %v190
    %230 = vmatprep.subr.mxu0 0.0
    %231 = vmatpush1.msra.mxu0 %v191
    %232 = vmatprep.subr.mxu0 0.0
    %233 = vmatpush1.msra.mxu0 %v192
    %234 = vmatprep.subr.mxu0 0.0
    %235 = vmatpush1.msra.mxu0 %v193
    %236 = vmatprep.subr.mxu0 0.0
    %237 = vmatpush1.msra.mxu0 %v194
    %238 = vmatprep.subr.mxu0 0.0
    %239 = vmatpush1.msra.mxu0 %v195
    %240 = vmatprep.subr.mxu0 0.0
    %241 = vmatpush1.msra.mxu0 %v196
    %242 = vmatprep.subr.mxu0 0.0
    %243 = vmatpush1.msra.mxu0 0.0
    %244 = vmatprep.subr.mxu0 0.0
    %245 = vmatpush1.msra.mxu0 0.0
    %246 = vmatprep.subr.mxu0 0.0
    %247 = vmatpush1.msra.mxu0 0.0
    %248 = vmatprep.subr.mxu0 0.0
    %249 = vmatpush1.msra.mxu0 0.0
    %250 = vmatprep.subr.mxu0 0.0
    %251 = vmatpush1.msra.mxu0 0.0
    %252 = vmatprep.subr.mxu0 0.0
    %253 = vmatpush1.msra.mxu0 0.0
    %254 = vmatprep.subr.mxu0 0.0
    %255 = vmatpush1.msra.mxu0 0.0
    %256 = vmatprep.subr.mxu0 0.0
    %257 = vmatpush1.msra.mxu0 0.0
    %258 = vmatprep.subr.mxu0 0.0
    %259 = vmatpush1.msra.mxu0 0.0
    %260 = vmatprep.subr.mxu0 0.0
    %261 = vmatpush1.msra.mxu0 0.0
    %262 = vmatprep.subr.mxu0 0.0
    %263 = vmatpush1.msra.mxu0 0.0
    %264 = vmatprep.subr.mxu0 0.0
    %265 = vmatpush1.msra.mxu0 0.0
    %266 = vmatprep.subr.mxu0 0.0
    %267 = vmatpush1.msra.mxu0 0.0
    %268 = vmatprep.subr.mxu0 0.0
    %269 = vmatpush1.msra.mxu0 0.0
    %270 = vmatprep.subr.mxu0 0.0
    %271 = vmatpush1.msra.mxu0 0.0
    %272 = vmatprep.subr.mxu0 0.0
    %273 = vmatpush1.msra.mxu0 0.0
    %274 = vmatprep.mubr.f32.mxu0 0.0
    %275 = vmatmul.mubr.f32.gmra.mrb[0].mxu0 %v208
    %v276 = vpop.f32.mrb[0].mxu0
    %v277 = vadd.f32 %v202, %v276
    %v278 = vpop.f32.mrb[0].mxu0
    %279 = vdwg.mxu0
    %280 = vst [vmem:[#allocation8] sm:$0x3] %v277
    // Predicated region
    $region34: #{tpu_custom_call.1} parent=1 // pred_check
      _
    $region35: #{tpu_custom_call.1} parent=1 // pred_check_branch
      %282 = sbr.rel (0) target = $region37
    $region36: #{tpu_custom_call.1} parent=1 // pred_region
      %s284 = ssub.s32 32, 32
      %285 = vsyncadd [#allocation4], %s284
      %s287 = sshll.u32 [#allocation8], 4
      %s288 = int_to_ptr.vmem [resolvable:$true] %s287
      %290 = dma.vmem_to_hbm [thread:$0]  %s288, 32, %s5, [#allocation4]
    $region37: #{tpu_custom_call.1} parent=1 // pred_fallthru
      _
    // Predicated region
    $region38: #{tpu_custom_call.1} parent=1 // pred_check
      _
    $region39: #{tpu_custom_call.1} parent=1 // pred_check_branch
      %292 = sbr.rel (0) target = $region41
    $region40: #{tpu_custom_call.1} parent=1 // pred_region
      %293 = dma.done [#allocation4], 32
    $region41: #{tpu_custom_call.1} parent=1 // pred_fallthru
      _
    %294 = vsyncpa [#allocation3], 1
    %295 = vsyncpa [#allocation6], 1
    %296 = vsyncpa [#allocation4], 1

</llo_original>
